<compile_context>
chip_gen: v6e
topology: v6e:2x2x1
jax: 0.10.0
libtpu: 0.0.40
codegen_flags: <defaults>
</compile_context>

<pallas_src>
import math
import functools

import jax
import jax.numpy as jnp
from jax.experimental import pallas as pl
from jax.experimental.pallas import tpu as pltpu


# Preferred tile edges (f32).
_TM, _TN, _TK = 256, 256, 512


def _pick_tile(dim, preferred, quantum):
    """Largest tile <= preferred that evenly divides `dim` and is a multiple of
    `quantum` (8 for sublane dims, 128 for lane dims); falls back to full dim
    (full-extent blocks are always legal)."""
    if dim <= preferred:
        return dim
    t = (preferred // quantum) * quantum
    while t >= quantum:
        if dim % t == 0:
            return t
        t -= quantum
    return dim


# ----------------------------- dense (tiled) --------------------------------

def _dense_kernel(x_ref, w_ref, b_ref, o_ref, acc_ref, *, act):
    @pl.when(pl.program_id(2) == 0)
    def _():
        acc_ref[...] = jnp.zeros_like(acc_ref)

    acc_ref[...] += jnp.dot(x_ref[...], w_ref[...],
                            preferred_element_type=jnp.float32)

    @pl.when(pl.program_id(2) == pl.num_programs(2) - 1)
    def _():
        y = acc_ref[...] + b_ref[...]
        if act == "gelu":                      # exact (erf) GELU, as in BERT
            y = 0.5 * y * (1.0 + jax.lax.erf(y * (1.0 / math.sqrt(2.0))))
        elif act == "tanh":
            y = jnp.tanh(y)
        o_ref[...] = y.astype(o_ref.dtype)


def dense(x, w, b, act=None):
    """o = act(x @ w + b).  x:(M,K) w:(K,N) b:(N,)."""
    M, K = x.shape
    N = w.shape[1]
    tm = _pick_tile(M, _TM, 8)
    tn = _pick_tile(N, _TN, 128)
    tk = _pick_tile(K, _TK, 128)
    kern = functools.partial(_dense_kernel, act=act)
    return pl.pallas_call(
        kern,
        out_shape=jax.ShapeDtypeStruct((M, N), jnp.float32),
        grid=(M // tm, N // tn, K // tk),
        in_specs=[
            pl.BlockSpec((tm, tk), lambda i, j, k: (i, k)),
            pl.BlockSpec((tk, tn), lambda i, j, k: (k, j)),
            pl.BlockSpec((1, tn), lambda i, j, k: (0, j)),
        ],
        out_specs=pl.BlockSpec((tm, tn), lambda i, j, k: (i, j)),
        scratch_shapes=[pltpu.VMEM((tm, tn), jnp.float32)],
        compiler_params=pltpu.CompilerParams(
            dimension_semantics=("parallel", "parallel", "arbitrary")),
    )(x, w, b.reshape(1, N))


# ------------------- dense + residual-add + LayerNorm -----------------------

def _dense_add_ln_kernel(x_ref, w_ref, b_ref, r_ref, g_ref, bt_ref, o_ref,
                         acc_ref, *, eps):
    @pl.when(pl.program_id(1) == 0)
    def _():
        acc_ref[...] = jnp.zeros_like(acc_ref)

    acc_ref[...] += jnp.dot(x_ref[...], w_ref[...],
                            preferred_element_type=jnp.float32)

    @pl.when(pl.program_id(1) == pl.num_programs(1) - 1)
    def _():
        y = acc_ref[...] + b_ref[...] + r_ref[...]
        mu = jnp.mean(y, axis=-1, keepdims=True)
        d = y - mu
        var = jnp.mean(d * d, axis=-1, keepdims=True)
        o_ref[...] = (d * jax.lax.rsqrt(var + eps) * g_ref[...]
                      + bt_ref[...]).astype(o_ref.dtype)


def dense_add_layernorm(x, w, b, residual, gamma, beta, eps=1e-12):
    """o = LayerNorm(x @ w + b + residual).  N is kept un-tiled so the row
    statistics can be computed in the matmul epilogue."""
    M, K = x.shape
    N = w.shape[1]
    tm = _pick_tile(M, _TM, 8)
    tk = _pick_tile(K, _TK, 128)
    kern = functools.partial(_dense_add_ln_kernel, eps=eps)
    return pl.pallas_call(
        kern,
        out_shape=jax.ShapeDtypeStruct((M, N), jnp.float32),
        grid=(M // tm, K // tk),
        in_specs=[
            pl.BlockSpec((tm, tk), lambda i, k: (i, k)),
            pl.BlockSpec((tk, N), lambda i, k: (k, 0)),
            pl.BlockSpec((1, N), lambda i, k: (0, 0)),
            pl.BlockSpec((tm, N), lambda i, k: (i, 0)),   # residual: resident over k
            pl.BlockSpec((1, N), lambda i, k: (0, 0)),
            pl.BlockSpec((1, N), lambda i, k: (0, 0)),
        ],
        out_specs=pl.BlockSpec((tm, N), lambda i, k: (i, 0)),
        scratch_shapes=[pltpu.VMEM((tm, N), jnp.float32)],
        compiler_params=pltpu.CompilerParams(
            dimension_semantics=("parallel", "arbitrary")),
    )(x, w, b.reshape(1, N), residual, gamma.reshape(1, N), beta.reshape(1, N))


# ------------------------------ layernorm ------------------------------------

def _layernorm_kernel(x_ref, g_ref, b_ref, o_ref, *, eps):
    x = x_ref[...]
    mu = jnp.mean(x, axis=-1, keepdims=True)
    d = x - mu
    var = jnp.mean(d * d, axis=-1, keepdims=True)
    o_ref[...] = (d * jax.lax.rsqrt(var + eps) * g_ref[...]
                  + b_ref[...]).astype(o_ref.dtype)


def layernorm(x, gamma, beta, eps=1e-12):
    M, H = x.shape
    tm = _pick_tile(M, _TM, 8)
    kern = functools.partial(_layernorm_kernel, eps=eps)
    return pl.pallas_call(
        kern,
        out_shape=jax.ShapeDtypeStruct((M, H), jnp.float32),
        grid=(M // tm,),
        in_specs=[
            pl.BlockSpec((tm, H), lambda i: (i, 0)),
            pl.BlockSpec((1, H), lambda i: (0, 0)),
            pl.BlockSpec((1, H), lambda i: (0, 0)),
        ],
        out_specs=pl.BlockSpec((tm, H), lambda i: (i, 0)),
        compiler_params=pltpu.CompilerParams(dimension_semantics=("parallel",)),
    )(x, gamma.reshape(1, H), beta.reshape(1, H))


# ------------------------------ attention ------------------------------------

def _attention_kernel(qkv_ref, m_ref, o_ref, *, num_heads, head_dim, scale):
    """Per-batch multi-head attention on the fused QKV activation.

    qkv_ref: (1, S, 3H)   m_ref: (1, 1, S) additive mask   o_ref: (1, S, H)
    Attention probabilities are NOT written back (default forward path).
    """
    H = num_heads * head_dim
    mask = m_ref[0]                                          # (1, S)
    for h in range(num_heads):                               # static unroll
        q = qkv_ref[0, :, h * head_dim:(h + 1) * head_dim]            # (S, dH)
        k = qkv_ref[0, :, H + h * head_dim:H + (h + 1) * head_dim]    # (S, dH)
        v = qkv_ref[0, :, 2 * H + h * head_dim:2 * H + (h + 1) * head_dim]
        # q @ k^T without materializing a transposed K: contract last dims.
        s = jax.lax.dot_general(q, k, (((1,), (1,)), ((), ())),
                                preferred_element_type=jnp.float32) * scale
        s = s + mask                                         # mask over keys
        s = s - jnp.max(s, axis=-1, keepdims=True)
        e = jnp.exp(s)
        p = e / jnp.sum(e, axis=-1, keepdims=True)
        ctx = jnp.dot(p, v, preferred_element_type=jnp.float32)       # (S, dH)
        # write this head's lane slice of the lane-dense (S, H) output block
        o_ref[0, :, h * head_dim:(h + 1) * head_dim] = ctx.astype(o_ref.dtype)


def multi_head_self_attention(qkv, ext_mask, num_heads):
    # qkv: (B, S, 3H); ext_mask: (B, 1, S) additive (0 / -10000)
    B, S, threeH = qkv.shape
    H = threeH // 3
    head_dim = H // num_heads
    kern = functools.partial(_attention_kernel, num_heads=num_heads,
                             head_dim=head_dim,
                             scale=1.0 / math.sqrt(head_dim))
    return pl.pallas_call(
        kern,
        out_shape=jax.ShapeDtypeStruct((B, S, H), jnp.float32),
        grid=(B,),
        in_specs=[
            pl.BlockSpec((1, S, threeH), lambda b: (b, 0, 0)),
            pl.BlockSpec((1, 1, S), lambda b: (b, 0, 0)),
        ],
        out_specs=pl.BlockSpec((1, S, H), lambda b: (b, 0, 0)),
        compiler_params=pltpu.CompilerParams(dimension_semantics=("parallel",)),
    )(qkv, ext_mask)


# ------------------------- pooler + classifier -------------------------------

def _pooler_classifier_kernel(x_ref, pw_ref, pb_ref, cw_ref, cb_ref, o_ref):
    pooled = jnp.tanh(jnp.dot(x_ref[...], pw_ref[...],
                              preferred_element_type=jnp.float32) + pb_ref[...])
    o_ref[...] = (jnp.dot(pooled, cw_ref[...],
                          preferred_element_type=jnp.float32)
                  + cb_ref[...]).astype(o_ref.dtype)


def pooler_classifier(cls_tokens, pool_w, pool_b, cls_w, cls_b):
    B, H = cls_tokens.shape
    L = cls_w.shape[1]
    return pl.pallas_call(
        _pooler_classifier_kernel,
        out_shape=jax.ShapeDtypeStruct((B, L), jnp.float32),
        grid=(1,),
        in_specs=[
            pl.BlockSpec((B, H), lambda i: (0, 0)),
            pl.BlockSpec((H, H), lambda i: (0, 0)),
            pl.BlockSpec((1, H), lambda i: (0, 0)),
            pl.BlockSpec((H, L), lambda i: (0, 0)),
            pl.BlockSpec((1, L), lambda i: (0, 0)),
        ],
        out_specs=pl.BlockSpec((B, L), lambda i: (0, 0)),
    )(cls_tokens, pool_w, pool_b.reshape(1, H), cls_w, cls_b.reshape(1, L))


# --------------------------- model / parameters ------------------------------

class Config:
    vocab_size = 100
    hidden_size = 32
    num_hidden_layers = 2
    num_attention_heads = 4
    intermediate_size = 64
    max_position_embeddings = 16
    type_vocab_size = 2
    hidden_dropout_prob = 0.1           # identity at inference
    attention_probs_dropout_prob = 0.1  # identity at inference
    layer_norm_eps = 1e-12


def init_params(key, cfg, num_labels):
    """Deterministic synthetic init (BERT-style N(0, 0.02) weights).
    Q/K/V projection weights are fused into a single (H, 3H) matrix."""
    H, I = cfg.hidden_size, cfg.intermediate_size
    keys = iter(jax.random.split(key, 64))

    def w(shape):
        return 0.02 * jax.random.normal(next(keys), shape, dtype=jnp.float32)

    def zeros(shape):
        return jnp.zeros(shape, dtype=jnp.float32)

    def ones(shape):
        return jnp.ones(shape, dtype=jnp.float32)

    p = {
        "word_emb": w((cfg.vocab_size, H)),
        "pos_emb": w((cfg.max_position_embeddings, H)),
        "type_emb": w((cfg.type_vocab_size, H)),
        "emb_ln_g": ones((H,)), "emb_ln_b": zeros((H,)),
        "layers": [],
        "pool_w": w((H, H)), "pool_b": zeros((H,)),
        "cls_w": w((H, num_labels)), "cls_b": zeros((num_labels,)),
    }
    for _ in range(cfg.num_hidden_layers):
        wq, wk, wv = w((H, H)), w((H, H)), w((H, H))
        p["layers"].append({
            "w_qkv": jnp.concatenate([wq, wk, wv], axis=1),   # (H, 3H)
            "b_qkv": zeros((3 * H,)),
            "wo": w((H, H)), "bo": zeros((H,)),
            "ln1_g": ones((H,)), "ln1_b": zeros((H,)),
            "wi": w((H, I)), "bi": zeros((I,)),
            "wo2": w((I, H)), "bo2": zeros((H,)),
            "ln2_g": ones((H,)), "ln2_b": zeros((H,)),
        })
    return p


def bert_for_sequence_classification(params, cfg, input_ids, token_type_ids,
                                     attention_mask):
    """Returns logits of shape (batch, num_labels) — the default forward path."""
    B, S = input_ids.shape
    H = cfg.hidden_size
    nH = cfg.num_attention_heads

    # ---- embeddings (gathers are glue; LayerNorm is a Pallas kernel) ----
    pos = jnp.arange(S, dtype=jnp.int32)
    emb = (params["word_emb"][input_ids]
           + params["pos_emb"][pos][None, :, :]
           + params["type_emb"][token_type_ids])
    h = layernorm(emb.reshape(B * S, H), params["emb_ln_g"],
                  params["emb_ln_b"], eps=cfg.layer_norm_eps)

    # extended additive attention mask: (B, 1, S) with 0 / -10000
    ext_mask = (1.0 - attention_mask.astype(jnp.float32)) * -10000.0
    ext_mask = ext_mask.reshape(B, 1, S)

    for lyr in params["layers"]:
        # fused Q|K|V projection (one tiled matmul instead of three)
        qkv = dense(h, lyr["w_qkv"], lyr["b_qkv"])                 # (B*S, 3H)
        ctx = multi_head_self_attention(qkv.reshape(B, S, 3 * H),
                                        ext_mask, nH)              # (B, S, H)
        ctx = ctx.reshape(B * S, H)
        # TODO(synk): attention-prob / hidden dropout omitted (identity at inference)
        # attention output projection fused with residual-add + LayerNorm
        h = dense_add_layernorm(ctx, lyr["wo"], lyr["bo"], h,
                                lyr["ln1_g"], lyr["ln1_b"],
                                eps=cfg.layer_norm_eps)
        # FFN: up-projection + exact GELU, then down-projection fused with add+LN
        inter = dense(h, lyr["wi"], lyr["bi"], act="gelu")
        h = dense_add_layernorm(inter, lyr["wo2"], lyr["bo2"], h,
                                lyr["ln2_g"], lyr["ln2_b"],
                                eps=cfg.layer_norm_eps)

    # ---- pooler (first token, tanh) + classifier, fused into one kernel ----
    cls = h.reshape(B, S, H)[:, 0, :]                              # (B, H)
    logits = pooler_classifier(cls, params["pool_w"], params["pool_b"],
                               params["cls_w"], params["cls_b"])
    return logits


# --------------------------------- main ---------------------------------------

if __name__ == "__main__":
    cfg = Config()
    num_labels = 2
    B, S = 2, 8

    key = jax.random.PRNGKey(0)
    k_param, k_ids, k_type = jax.random.split(key, 3)

    params = init_params(k_param, cfg, num_labels)

    input_ids = jax.random.randint(k_ids, (B, S), 0, cfg.vocab_size,
                                   dtype=jnp.int32)
    token_type_ids = jax.random.randint(k_type, (B, S), 0, cfg.type_vocab_size,
                                        dtype=jnp.int32)
    attention_mask = jnp.array([[1, 1, 1, 1, 1, 1, 1, 1],
                                [1, 1, 1, 1, 1, 0, 0, 0]], dtype=jnp.int32)

    logits = bert_for_sequence_classification(params, cfg, input_ids,
                                              token_type_ids, attention_mask)
    logits = jax.block_until_ready(logits)
    assert logits.shape == (B, num_labels)
    assert bool(jnp.all(jnp.isfinite(logits)))
    print("KERNEL_OK")
</pallas_src>

<mosaic_0001>
module attributes {stable_mosaic.version = 11 : i64} {
  func.func @_layernorm_kernel(%arg0: i32, %arg1: memref<16x32xf32, #tpu.memory_space<vmem>>, %arg2: memref<1x32xf32, #tpu.memory_space<vmem>>, %arg3: memref<1x32xf32, #tpu.memory_space<vmem>>, %arg4: memref<16x32xf32, #tpu.memory_space<vmem>>) attributes {dimension_semantics = [#tpu.dimension_semantics<parallel>], iteration_bounds = array<i64: 1>, scalar_prefetch = 0 : i64, scratch_operands = 0 : i64, tpu.core_type = #tpu.core_type<tc>, window_params = [{transform_indices = @transform_0, window_bounds = array<i64: 16, 32>}, {pipeline_mode = #tpu.pipeline_mode<synchronous>, transform_indices = @transform_1, window_bounds = array<i64: 1, 32>}, {pipeline_mode = #tpu.pipeline_mode<synchronous>, transform_indices = @transform_2, window_bounds = array<i64: 1, 32>}, {transform_indices = @transform_3, window_bounds = array<i64: 16, 32>}]} {
    %c0 = arith.constant 0 : index
    %c0_0 = arith.constant 0 : index
    %0 = vector.load %arg1[%c0, %c0_0] : memref<16x32xf32, #tpu.memory_space<vmem>>, vector<16x32xf32>
    %cst = arith.constant dense<0.000000e+00> : vector<16xf32>
    %1 = vector.multi_reduction <add>, %0, %cst [1] : vector<16x32xf32> to vector<16xf32>
    %2 = vector.shape_cast %1 : vector<16xf32> to vector<16x1xf32>
    %cst_1 = arith.constant 3.200000e+01 : f32
    %3 = vector.broadcast %cst_1 : f32 to vector<16x1xf32>
    %4 = arith.divf %2, %3 : vector<16x1xf32>
    %5 = vector.broadcast %4 : vector<16x1xf32> to vector<16x32xf32>
    %6 = arith.subf %0, %5 : vector<16x32xf32>
    %7 = arith.mulf %6, %6 : vector<16x32xf32>
    %cst_2 = arith.constant dense<0.000000e+00> : vector<16xf32>
    %8 = vector.multi_reduction <add>, %7, %cst_2 [1] : vector<16x32xf32> to vector<16xf32>
    %9 = vector.shape_cast %8 : vector<16xf32> to vector<16x1xf32>
    %cst_3 = arith.constant 3.200000e+01 : f32
    %10 = vector.broadcast %cst_3 : f32 to vector<16x1xf32>
    %11 = arith.divf %9, %10 : vector<16x1xf32>
    %cst_4 = arith.constant 9.99999996E-13 : f32
    %12 = vector.broadcast %cst_4 : f32 to vector<16x1xf32>
    %13 = arith.addf %11, %12 : vector<16x1xf32>
    %14 = math.rsqrt %13 : vector<16x1xf32>
    %15 = vector.broadcast %14 : vector<16x1xf32> to vector<16x32xf32>
    %16 = arith.mulf %6, %15 : vector<16x32xf32>
    %c0_5 = arith.constant 0 : index
    %c0_6 = arith.constant 0 : index
    %17 = vector.load %arg2[%c0_5, %c0_6] : memref<1x32xf32, #tpu.memory_space<vmem>>, vector<1x32xf32>
    %18 = vector.broadcast %17 : vector<1x32xf32> to vector<16x32xf32>
    %19 = arith.mulf %16, %18 : vector<16x32xf32>
    %c0_7 = arith.constant 0 : index
    %c0_8 = arith.constant 0 : index
    %20 = vector.load %arg3[%c0_7, %c0_8] : memref<1x32xf32, #tpu.memory_space<vmem>>, vector<1x32xf32>
    %21 = vector.broadcast %20 : vector<1x32xf32> to vector<16x32xf32>
    %22 = arith.addf %19, %21 : vector<16x32xf32>
    %c0_9 = arith.constant 0 : index
    %c0_10 = arith.constant 0 : index
    %23 = vector.load %arg4[%c0_9, %c0_10] : memref<16x32xf32, #tpu.memory_space<vmem>>, vector<16x32xf32>
    tpu.vector_store %arg4[%c0_9, %c0_10], %22 {strides = array<i32>} : memref<16x32xf32, #tpu.memory_space<vmem>>, vector<16x32xf32>,
    return
  }
  func.func @transform_0(%arg0: i32) -> (i32, i32) {
    %c0_i32 = arith.constant 0 : i32
    %c0_i32_0 = arith.constant 0 : i32
    return %arg0, %c0_i32 : i32, i32
  }
  func.func @transform_1(%arg0: i32) -> (i32, i32) {
    %c0_i32 = arith.constant 0 : i32
    %c0_i32_0 = arith.constant 0 : i32
    %c0_i32_1 = arith.constant 0 : i32
    return %c0_i32, %c0_i32_0 : i32, i32
  }
  func.func @transform_2(%arg0: i32) -> (i32, i32) {
    %c0_i32 = arith.constant 0 : i32
    %c0_i32_0 = arith.constant 0 : i32
    %c0_i32_1 = arith.constant 0 : i32
    return %c0_i32, %c0_i32_0 : i32, i32
  }
  func.func @transform_3(%arg0: i32) -> (i32, i32) {
    %c0_i32 = arith.constant 0 : i32
    %c0_i32_0 = arith.constant 0 : i32
    return %arg0, %c0_i32 : i32, i32
  }
}

</mosaic_0001>

<llo_original>
// kernel: tpu_custom_call.1
$region0: #{tpu_custom_call.1}
  #allocation0 [shape = 'u32[]', space=smem, size = 0x4, offset = 0x4, fixed_abs, tag = 'smem constant byte address 0x4 - core index']
  #allocation1 [shape = 'u32[144,128]{1,0:T(1,128)}', space=vmem, size = 0x12000, scoped, tag = 'internal scratch']
  %s0 = inlined_call_operand.hbm [shape: f32[16,32], index: 0, kind: input, shape index: {}]
  %s1 = inlined_call_operand.vmem [shape: f32[1,32], index: 1, kind: input, shape index: {}]
  %s2 = inlined_call_operand.vmem [shape: f32[1,32], index: 2, kind: input, shape index: {}]
  %s3 = inlined_call_operand.hbm [shape: f32[16,32], index: 3, kind: output, shape index: {}]
  %s4 = sld [smem:[#allocation0]]
  $region26: #{tpu_custom_call.1} parent=0
    _
  %s6 = ssub.s32 1, %s4
  %s7 = scalar_select 0, %s6, %s4
  $region1: #{tpu_custom_call.1} parent=0
    #allocation2 [shape = 'u8[8192]{0}', space=vmem, size = 0x2000, scoped, tag = 'input window, operand 0, single buffered']
    #allocation3 [shape = 's32[1]{0}', space=sflag, size = 0x4, scoped, tag = 'scoped memory for tpu_custom_call.1']
    #allocation4 [shape = 's32[1]{0}', space=sflag, size = 0x4, scoped, tag = 'scoped memory for tpu_custom_call.1']
    #allocation5 [shape = 'u8[8192]{0}', space=vmem, size = 0x2000, scoped, tag = 'output window, operand 0, single buffered']
    %8 = vsyncpa [#allocation3], 0
    %9 = vsyncpa [#allocation4], 0
    // Predicated region
    $region2: #{tpu_custom_call.1} parent=1 // pred_check
      _
    $region3: #{tpu_custom_call.1} parent=1 // pred_check_branch
      %11 = sbr.rel (0) target = $region5
    $region4: #{tpu_custom_call.1} parent=1 // pred_region
      %s13 = ssub.s32 256, 256
      %14 = vsyncadd [#allocation3], %s13
      %s15 = sshll.u32 [#allocation2], 4
      %s16 = int_to_ptr.vmem [resolvable:$true] %s15
      %21 = dma.hbm_to_vmem [thread:$0]  %s0, 256, %s16, [#allocation3], 128, 128, 8
    $region5: #{tpu_custom_call.1} parent=1 // pred_fallthru
      _
    // Predicated region
    $region6: #{tpu_custom_call.1} parent=1 // pred_check
      _
    $region7: #{tpu_custom_call.1} parent=1 // pred_check_branch
      %23 = sbr.rel (0) target = $region9
    $region8: #{tpu_custom_call.1} parent=1 // pred_region
      _
    $region9: #{tpu_custom_call.1} parent=1 // pred_fallthru
      _
    // Predicated region
    $region10: #{tpu_custom_call.1} parent=1 // pred_check
      _
    $region11: #{tpu_custom_call.1} parent=1 // pred_check_branch
      %25 = sbr.rel (0) target = $region13
    $region12: #{tpu_custom_call.1} parent=1 // pred_region
      _
    $region13: #{tpu_custom_call.1} parent=1 // pred_fallthru
      _
    // Predicated region
    $region14: #{tpu_custom_call.1} parent=1 // pred_check
      _
    $region15: #{tpu_custom_call.1} parent=1 // pred_check_branch
      %27 = sbr.rel (0) target = $region17
    $region16: #{tpu_custom_call.1} parent=1 // pred_region
      %28 = dma.done [#allocation3], 256
    $region17: #{tpu_custom_call.1} parent=1 // pred_fallthru
      _
    %v29 = vld [vmem:[#allocation2] sm:$0xff]
    %v30 = vld [vmem:[#allocation2 + $0x8] sm:$0xff]
    %vm31 = vcmask 261120
    %v32 = vsel %vm31, %v29, 0.0
    %33 = vadd.xlane.f32.xlu0 %v32
    %v34 = vpop.xlane.xlu0 %33
    %v35 = vsel %vm31, %v30, 0.0
    %36 = vadd.xlane.f32.xlu0 %v35
    %v37 = vpop.xlane.xlu0 %36
    %v38 = vrcp.pop 32.0
    %v39 = vmul.f32 %v34, %v38
    %v40 = vmul.f32 %v37, %v38
    %v41 = vsub.f32 %v29, %v39
    %v42 = vsub.f32 %v30, %v40
    %v43 = vmul.f32 %v41, %v41
    %v44 = vmul.f32 %v42, %v42
    %v45 = vsel %vm31, %v43, 0.0
    %46 = vadd.xlane.f32.xlu0 %v45
    %v47 = vpop.xlane.xlu0 %46
    %v48 = vsel %vm31, %v44, 0.0
    %49 = vadd.xlane.f32.xlu0 %v48
    %v50 = vpop.xlane.xlu0 %49
    %v51 = vmul.f32 %v47, %v38
    %v52 = vmul.f32 %v50, %v38
    %v53 = vadd.f32 %v51, 1e-12
    %v54 = vadd.f32 %v52, 1e-12
    %v55 = vrsqrt.pop %v53
    %v56 = vrsqrt.pop %v54
    %v57 = vmul.f32 %v41, %v55
    %v58 = vmul.f32 %v42, %v56
    %v59 = vld [vmem:[%s1] sm:$0x1]
    %v61 = vlaneseq
    %v62 = vshrl.u32 %v61, 7
    %v63 = vsub.s32 0, %v62
    %v64 = vrot.slane %v59, %v63
    %v66 = vmul.f32 %v57, %v64
    %v67 = vmul.f32 %v58, %v64
    %v68 = vld [vmem:[%s2] sm:$0x1]
    %v70 = vlaneseq
    %v71 = vshrl.u32 %v70, 7
    %v72 = vsub.s32 0, %v71
    %v73 = vrot.slane %v68, %v72
    %v75 = vadd.f32 %v66, %v73
    %v76 = vadd.f32 %v67, %v73
    %77 = vst.msk [vmem:[#allocation5] sm:$0xff] %vm31, %v75
    %78 = vst.msk [vmem:[#allocation5 + $0x8] sm:$0xff] %vm31, %v76
    // Predicated region
    $region18: #{tpu_custom_call.1} parent=1 // pred_check
      _
    $region19: #{tpu_custom_call.1} parent=1 // pred_check_branch
      %80 = sbr.rel (0) target = $region21
    $region20: #{tpu_custom_call.1} parent=1 // pred_region
      %s82 = ssub.s32 256, 256
      %83 = vsyncadd [#allocation4], %s82
      %s84 = sshll.u32 [#allocation5], 4
      %s85 = int_to_ptr.vmem [resolvable:$true] %s84
      %90 = dma.vmem_to_hbm [thread:$0]  %s85, 256, %s3, [#allocation4], 128, 128, 8
    $region21: #{tpu_custom_call.1} parent=1 // pred_fallthru
      _
    // Predicated region
    $region22: #{tpu_custom_call.1} parent=1 // pred_check
      _
    $region23: #{tpu_custom_call.1} parent=1 // pred_check_branch
      %92 = sbr.rel (0) target = $region25
    $region24: #{tpu_custom_call.1} parent=1 // pred_region
      %93 = dma.done [#allocation4], 256
    $region25: #{tpu_custom_call.1} parent=1 // pred_fallthru
      _
    %94 = vsyncpa [#allocation3], 1
    %95 = vsyncpa [#allocation4], 1

</llo_original>
